<compile_context>
chip_gen: v6e
topology: v6e:2x2x1
jax: 0.10.0
libtpu: 0.0.40
codegen_flags: <defaults>
</compile_context>

<pallas_src>
import math

import jax
import jax.numpy as jnp
from jax.experimental import pallas as pl
from jax.experimental.pallas import tpu as pltpu


# --------------------------------------------------------------------------
# Kernel
# --------------------------------------------------------------------------
def _swiglu_ffn_kernel(x_ref, w1_ref, b1_ref, w2_ref, b2_ref, w3_ref, b3_ref,
                       o_ref, acc_ref):
    h = pl.program_id(1)

    @pl.when(h == 0)
    def _():
        acc_ref[...] = jnp.zeros_like(acc_ref)

    x = x_ref[...]  # native dtype straight to the MXU

    # x1 = x @ W1^T + b1   (first chunk half), f32 accumulation on the MXU.
    x1 = jnp.dot(x, w1_ref[...], preferred_element_type=jnp.float32)
    x1 = x1 + b1_ref[...].astype(jnp.float32)
    # x2 = x @ W2^T + b2   (second chunk half).
    x2 = jnp.dot(x, w2_ref[...], preferred_element_type=jnp.float32)
    x2 = x2 + b2_ref[...].astype(jnp.float32)

    # SwiGLU gate in f32 on the VPU/EUP: silu(x1) * x2.
    gate = (x1 * jax.nn.sigmoid(x1)) * x2

    # Accumulate the output projection over hidden tiles.
    acc_ref[...] += jnp.dot(gate.astype(w3_ref.dtype), w3_ref[...],
                            preferred_element_type=jnp.float32)

    @pl.when(h == pl.num_programs(1) - 1)
    def _():
        o_ref[...] = (acc_ref[...] +
                      b3_ref[...].astype(jnp.float32)).astype(o_ref.dtype)


# --------------------------------------------------------------------------
# Wrapper
# --------------------------------------------------------------------------
def _round_up(n, m):
    return ((n + m - 1) // m) * m


def _pad_axis(a, axis, target):
    pad = target - a.shape[axis]
    if pad == 0:
        return a
    widths = [(0, 0)] * a.ndim
    widths[axis] = (0, pad)
    return jnp.pad(a, widths)


def prepare_swiglu_params(w12, b12, w3, b3):
    """One-time parameter prep (do NOT call per forward):

    - split w12 into its two chunk halves (exactly `.chunk(2, dim=-1)`),
    - transpose to (in, out) row-major matmul layout,
    - zero-pad every feature dim to a multiple of 128 (lane-dense).
    Zero padding is numerically inert: padded weight rows/cols and bias
    entries are 0, so silu(0)*0 = 0 contributes nothing.
    """
    two_h, in_f = w12.shape
    hidden = two_h // 2
    out_f, hidden_w3 = w3.shape
    assert hidden_w3 == hidden

    in_p = _round_up(in_f, 128)
    hid_p = _round_up(hidden, 128)
    out_p = _round_up(out_f, 128)

    w1_t = _pad_axis(_pad_axis(jnp.transpose(w12[:hidden, :]), 0, in_p), 1, hid_p)
    w2_t = _pad_axis(_pad_axis(jnp.transpose(w12[hidden:, :]), 0, in_p), 1, hid_p)
    w3_t = _pad_axis(_pad_axis(jnp.transpose(w3), 0, hid_p), 1, out_p)
    b1 = _pad_axis(b12[:hidden].reshape(1, hidden), 1, hid_p)
    b2 = _pad_axis(b12[hidden:].reshape(1, hidden), 1, hid_p)
    b3r = _pad_axis(b3.reshape(1, out_f), 1, out_p)

    return dict(w1=w1_t, b1=b1, w2=w2_t, b2=b2, w3=w3_t, b3=b3r,
                in_features=in_f, hidden=hidden, out_features=out_f)


def swiglu_ffn_pallas(x, params, *, token_block=256, hidden_block=512):
    """SwiGLU FFN forward.  x: (..., in_features); params from prepare_swiglu_params."""
    in_f = params["in_features"]
    out_f = params["out_features"]
    w1, b1, w2, b2, w3, b3 = (params[k] for k in ("w1", "b1", "w2", "b2", "w3", "b3"))
    in_p, hid_p = w1.shape
    out_p = w3.shape[1]

    *lead, in_f_x = x.shape
    assert in_f_x == in_f
    n_tokens = math.prod(lead) if lead else 1
    x2d = x.reshape(n_tokens, in_f)

    # Token tile: large (256) to feed the MXU M dim; shrink for tiny inputs.
    tm = min(token_block, _round_up(n_tokens, 8))
    n_tok_p = _round_up(n_tokens, tm)
    x2d = _pad_axis(_pad_axis(x2d, 0, n_tok_p), 1, in_p)

    # Hidden tile: largest multiple of 128 <= hidden_block that divides hid_p.
    th = hid_p
    if th > hidden_block:
        m = hid_p // 128
        d = max(dd for dd in range(1, hidden_block // 128 + 1) if m % dd == 0)
        th = 128 * d
    n_hid_tiles = hid_p // th

    grid = (n_tok_p // tm, n_hid_tiles)

    # VMEM budget from the actual tile footprint (double-buffered blocks +
    # single f32 accumulator), clamped so it is valid on v7x (64 MiB/TC).
    isz = lambda a: jnp.dtype(a.dtype).itemsize
    footprint = 2 * (
        tm * in_p * isz(x2d)
        + 2 * in_p * th * isz(w1)
        + th * out_p * isz(w3)
        + tm * out_p * isz(x2d)
        + 2 * th * isz(b1) + out_p * isz(b3)
    ) + tm * out_p * 4
    vmem_limit = int(min(max(2 * footprint + (16 << 20), 32 << 20), 64 << 20))

    out2d = pl.pallas_call(
        _swiglu_ffn_kernel,
        out_shape=jax.ShapeDtypeStruct((n_tok_p, out_p), x.dtype),
        grid_spec=pltpu.PrefetchScalarGridSpec(
            num_scalar_prefetch=0,
            grid=grid,
            in_specs=[
                pl.BlockSpec((tm, in_p), lambda i, h: (i, 0)),    # x tile (resident over h)
                pl.BlockSpec((in_p, th), lambda i, h: (0, h)),    # W1^T slice
                pl.BlockSpec((1, th), lambda i, h: (0, h)),       # b1 slice
                pl.BlockSpec((in_p, th), lambda i, h: (0, h)),    # W2^T slice
                pl.BlockSpec((1, th), lambda i, h: (0, h)),       # b2 slice
                pl.BlockSpec((th, out_p), lambda i, h: (h, 0)),   # W3^T slice
                pl.BlockSpec((1, out_p), lambda i, h: (0, 0)),    # b3 (resident)
            ],
            out_specs=pl.BlockSpec((tm, out_p), lambda i, h: (i, 0)),
            scratch_shapes=[pltpu.VMEM((tm, out_p), jnp.float32)],
        ),
        compiler_params=pltpu.CompilerParams(
            dimension_semantics=("parallel", "arbitrary"),
            vmem_limit_bytes=vmem_limit,
        ),
    )(x2d, w1, b1, w2, b2, w3, b3)

    out = out2d[:n_tokens, :out_f]
    return out.reshape(*lead, out_f)


# --------------------------------------------------------------------------
# Pure-JAX reference matching the PyTorch module.
# --------------------------------------------------------------------------
def swiglu_ffn_ref(x, w12, b12, w3, b3):
    x12 = jnp.einsum("...d,hd->...h", x, w12) + b12
    hidden_f = w12.shape[0] // 2
    x1 = x12[..., :hidden_f]
    x2 = x12[..., hidden_f:]
    h = jax.nn.silu(x1) * x2
    return jnp.einsum("...h,oh->...o", h, w3) + b3


if __name__ == "__main__":
    # Small shapes implied by the module: tokens of dim in_features.
    batch, seq = 2, 8
    in_features = 32
    hidden_features = 32
    out_features = 32

    key = jax.random.PRNGKey(0)
    kx, kw12, kb12, kw3, kb3 = jax.random.split(key, 5)

    x = jax.random.normal(kx, (batch, seq, in_features), dtype=jnp.float32)

    # Deterministic init mimicking nn.Linear's U(-1/sqrt(fan_in), 1/sqrt(fan_in)).
    lim12 = 1.0 / (in_features ** 0.5)
    w12 = jax.random.uniform(kw12, (2 * hidden_features, in_features),
                             minval=-lim12, maxval=lim12, dtype=jnp.float32)
    b12 = jax.random.uniform(kb12, (2 * hidden_features,),
                             minval=-lim12, maxval=lim12, dtype=jnp.float32)
    lim3 = 1.0 / (hidden_features ** 0.5)
    w3 = jax.random.uniform(kw3, (out_features, hidden_features),
                            minval=-lim3, maxval=lim3, dtype=jnp.float32)
    b3 = jax.random.uniform(kb3, (out_features,),
                            minval=-lim3, maxval=lim3, dtype=jnp.float32)

    # One-time parameter prep (transpose/split/pad), then the kernel call.
    params = prepare_swiglu_params(w12, b12, w3, b3)
    out = swiglu_ffn_pallas(x, params, token_block=256, hidden_block=512)
    out = jax.block_until_ready(out)

    ref = swiglu_ffn_ref(x, w12, b12, w3, b3)
    assert out.shape == (batch, seq, out_features)
    assert jnp.allclose(out, ref, atol=1e-5, rtol=1e-5), "mismatch vs reference"

    print("KERNEL_OK")
</pallas_src>

<mosaic_0001>
module attributes {stable_mosaic.version = 11 : i64} {
  func.func @_swiglu_ffn_kernel(%arg0: i32, %arg1: i32, %arg2: memref<16x128xf32, #tpu.memory_space<vmem>>, %arg3: memref<128x128xf32, #tpu.memory_space<vmem>>, %arg4: memref<1x128xf32, #tpu.memory_space<vmem>>, %arg5: memref<128x128xf32, #tpu.memory_space<vmem>>, %arg6: memref<1x128xf32, #tpu.memory_space<vmem>>, %arg7: memref<128x128xf32, #tpu.memory_space<vmem>>, %arg8: memref<1x128xf32, #tpu.memory_space<vmem>>, %arg9: memref<16x128xf32, #tpu.memory_space<vmem>>, %arg10: memref<16x128xf32, #tpu.memory_space<vmem>>) attributes {dimension_semantics = [#tpu.dimension_semantics<parallel>, #tpu.dimension_semantics<arbitrary>], iteration_bounds = array<i64: 1, 1>, scalar_prefetch = 0 : i64, scratch_operands = 1 : i64, tpu.core_type = #tpu.core_type<tc>, window_params = [{transform_indices = @transform_0, window_bounds = array<i64: 16, 128>}, {transform_indices = @transform_1, window_bounds = array<i64: 128, 128>}, {transform_indices = @transform_2, window_bounds = array<i64: 1, 128>}, {transform_indices = @transform_3, window_bounds = array<i64: 128, 128>}, {transform_indices = @transform_4, window_bounds = array<i64: 1, 128>}, {transform_indices = @transform_5, window_bounds = array<i64: 128, 128>}, {pipeline_mode = #tpu.pipeline_mode<synchronous>, transform_indices = @transform_6, window_bounds = array<i64: 1, 128>}, {transform_indices = @transform_7, window_bounds = array<i64: 16, 128>}]} {
    %c0_i32 = arith.constant 0 : i32
    %0 = arith.cmpi eq, %arg1, %c0_i32 : i32
    %1 = arith.extui %0 : i1 to i32
    %c0_i32_0 = arith.constant 0 : i32
    %2 = arith.cmpi ne, %1, %c0_i32_0 : i32
    scf.if %2 {
      %cst_21 = arith.constant 0.000000e+00 : f32
      %29 = vector.broadcast %cst_21 : f32 to vector<16x128xf32>
      %c0_22 = arith.constant 0 : index
      %c0_23 = arith.constant 0 : index
      %30 = vector.load %arg10[%c0_22, %c0_23] : memref<16x128xf32, #tpu.memory_space<vmem>>, vector<16x128xf32>
      tpu.vector_store %arg10[%c0_22, %c0_23], %29 {strides = array<i32>} : memref<16x128xf32, #tpu.memory_space<vmem>>, vector<16x128xf32>,
    } else {
    }
    %c0 = arith.constant 0 : index
    %c0_1 = arith.constant 0 : index
    %3 = vector.load %arg2[%c0, %c0_1] : memref<16x128xf32, #tpu.memory_space<vmem>>, vector<16x128xf32>
    %c0_2 = arith.constant 0 : index
    %c0_3 = arith.constant 0 : index
    %4 = vector.load %arg3[%c0_2, %c0_3] : memref<128x128xf32, #tpu.memory_space<vmem>>, vector<128x128xf32>
    %cst = arith.constant dense<0.000000e+00> : vector<16x128xf32>
    %5 = tpu.matmul %3, %4, %cst {dimension_numbers = #tpu.dot_dimension_numbers<[1], [0], [0], [1], [0, 0, 1, 1], [], []>} : vector<16x128xf32>, vector<128x128xf32>, vector<16x128xf32> -> vector<16x128xf32>
    %c0_4 = arith.constant 0 : index
    %c0_5 = arith.constant 0 : index
    %6 = vector.load %arg4[%c0_4, %c0_5] : memref<1x128xf32, #tpu.memory_space<vmem>>, vector<1x128xf32>
    %7 = vector.broadcast %6 : vector<1x128xf32> to vector<16x128xf32>
    %8 = arith.addf %5, %7 : vector<16x128xf32>
    %c0_6 = arith.constant 0 : index
    %c0_7 = arith.constant 0 : index
    %9 = vector.load %arg5[%c0_6, %c0_7] : memref<128x128xf32, #tpu.memory_space<vmem>>, vector<128x128xf32>
    %cst_8 = arith.constant dense<0.000000e+00> : vector<16x128xf32>
    %10 = tpu.matmul %3, %9, %cst_8 {dimension_numbers = #tpu.dot_dimension_numbers<[1], [0], [0], [1], [0, 0, 1, 1], [], []>} : vector<16x128xf32>, vector<128x128xf32>, vector<16x128xf32> -> vector<16x128xf32>
    %c0_9 = arith.constant 0 : index
    %c0_10 = arith.constant 0 : index
    %11 = vector.load %arg6[%c0_9, %c0_10] : memref<1x128xf32, #tpu.memory_space<vmem>>, vector<1x128xf32>
    %12 = vector.broadcast %11 : vector<1x128xf32> to vector<16x128xf32>
    %13 = arith.addf %10, %12 : vector<16x128xf32>
    %14 = arith.negf %8 : vector<16x128xf32>
    %15 = math.exp %14 : vector<16x128xf32>
    %cst_11 = arith.constant 1.000000e+00 : f32
    %16 = vector.broadcast %cst_11 : f32 to vector<16x128xf32>
    %17 = arith.addf %16, %15 : vector<16x128xf32>
    %18 = arith.divf %16, %17 : vector<16x128xf32>
    %19 = arith.mulf %8, %18 : vector<16x128xf32>
    %20 = arith.mulf %19, %13 : vector<16x128xf32>
    %c0_12 = arith.constant 0 : index
    %c0_13 = arith.constant 0 : index
    %21 = vector.load %arg10[%c0_12, %c0_13] : memref<16x128xf32, #tpu.memory_space<vmem>>, vector<16x128xf32>
    %c0_14 = arith.constant 0 : index
    %c0_15 = arith.constant 0 : index
    %22 = vector.load %arg7[%c0_14, %c0_15] : memref<128x128xf32, #tpu.memory_space<vmem>>, vector<128x128xf32>
    %cst_16 = arith.constant dense<0.000000e+00> : vector<16x128xf32>
    %23 = tpu.matmul %20, %22, %cst_16 {dimension_numbers = #tpu.dot_dimension_numbers<[1], [0], [0], [1], [0, 0, 1, 1], [], []>} : vector<16x128xf32>, vector<128x128xf32>, vector<16x128xf32> -> vector<16x128xf32>
    %24 = arith.addf %21, %23 : vector<16x128xf32>
    %c0_17 = arith.constant 0 : index
    %c0_18 = arith.constant 0 : index
    %25 = vector.load %arg10[%c0_17, %c0_18] : memref<16x128xf32, #tpu.memory_space<vmem>>, vector<16x128xf32>
    tpu.vector_store %arg10[%c0_17, %c0_18], %24 {strides = array<i32>} : memref<16x128xf32, #tpu.memory_space<vmem>>, vector<16x128xf32>,
    %c0_i32_19 = arith.constant 0 : i32
    %26 = arith.cmpi eq, %arg1, %c0_i32_19 : i32
    %27 = arith.extui %26 : i1 to i32
    %c0_i32_20 = arith.constant 0 : i32
    %28 = arith.cmpi ne, %27, %c0_i32_20 : i32
    scf.if %28 {
      %c0_21 = arith.constant 0 : index
      %c0_22 = arith.constant 0 : index
      %29 = vector.load %arg10[%c0_21, %c0_22] : memref<16x128xf32, #tpu.memory_space<vmem>>, vector<16x128xf32>
      %c0_23 = arith.constant 0 : index
      %c0_24 = arith.constant 0 : index
      %30 = vector.load %arg8[%c0_23, %c0_24] : memref<1x128xf32, #tpu.memory_space<vmem>>, vector<1x128xf32>
      %31 = vector.broadcast %30 : vector<1x128xf32> to vector<16x128xf32>
      %32 = arith.addf %29, %31 : vector<16x128xf32>
      %c0_25 = arith.constant 0 : index
      %c0_26 = arith.constant 0 : index
      %33 = vector.load %arg9[%c0_25, %c0_26] : memref<16x128xf32, #tpu.memory_space<vmem>>, vector<16x128xf32>
      tpu.vector_store %arg9[%c0_25, %c0_26], %32 {strides = array<i32>} : memref<16x128xf32, #tpu.memory_space<vmem>>, vector<16x128xf32>,
    } else {
    }
    return
  }
  func.func @transform_0(%arg0: i32, %arg1: i32) -> (i32, i32) {
    %c0_i32 = arith.constant 0 : i32
    %c0_i32_0 = arith.constant 0 : i32
    return %arg0, %c0_i32 : i32, i32
  }
  func.func @transform_1(%arg0: i32, %arg1: i32) -> (i32, i32) {
    %c0_i32 = arith.constant 0 : i32
    %c0_i32_0 = arith.constant 0 : i32
    return %c0_i32, %arg1 : i32, i32
  }
  func.func @transform_2(%arg0: i32, %arg1: i32) -> (i32, i32) {
    %c0_i32 = arith.constant 0 : i32
    %c0_i32_0 = arith.constant 0 : i32
    return %c0_i32, %arg1 : i32, i32
  }
  func.func @transform_3(%arg0: i32, %arg1: i32) -> (i32, i32) {
    %c0_i32 = arith.constant 0 : i32
    %c0_i32_0 = arith.constant 0 : i32
    return %c0_i32, %arg1 : i32, i32
  }
  func.func @transform_4(%arg0: i32, %arg1: i32) -> (i32, i32) {
    %c0_i32 = arith.constant 0 : i32
    %c0_i32_0 = arith.constant 0 : i32
    return %c0_i32, %arg1 : i32, i32
  }
  func.func @transform_5(%arg0: i32, %arg1: i32) -> (i32, i32) {
    %c0_i32 = arith.constant 0 : i32
    %c0_i32_0 = arith.constant 0 : i32
    return %arg1, %c0_i32 : i32, i32
  }
  func.func @transform_6(%arg0: i32, %arg1: i32) -> (i32, i32) {
    %c0_i32 = arith.constant 0 : i32
    %c0_i32_0 = arith.constant 0 : i32
    %c0_i32_1 = arith.constant 0 : i32
    return %c0_i32, %c0_i32_0 : i32, i32
  }
  func.func @transform_7(%arg0: i32, %arg1: i32) -> (i32, i32) {
    %c0_i32 = arith.constant 0 : i32
    %c0_i32_0 = arith.constant 0 : i32
    return %arg0, %c0_i32 : i32, i32
  }
}

</mosaic_0001>

<llo_original>
// kernel: tpu_custom_call.1
$region0: #{tpu_custom_call.1}
  #allocation0 [shape = 'u32[]', space=smem, size = 0x4, offset = 0x4, fixed_abs, tag = 'smem constant byte address 0x4 - core index']
  #allocation1 [shape = 'u32[144,128]{1,0:T(1,128)}', space=vmem, size = 0x12000, scoped, tag = 'internal scratch']
  #allocation2 [shape = 'f32[16,128]{1,0:T(8,128)}', space=vmem, size = 0x2000, scoped, tag = 'scratch operand']
  %s0 = inlined_call_operand.hbm [shape: f32[16,128], index: 0, kind: input, shape index: {}]
  %s1 = inlined_call_operand.hbm [shape: f32[128,128], index: 1, kind: input, shape index: {}]
  %s2 = inlined_call_operand.vmem [shape: f32[1,128], index: 2, kind: input, shape index: {}]
  %s3 = inlined_call_operand.hbm [shape: f32[128,128], index: 3, kind: input, shape index: {}]
  %s4 = inlined_call_operand.vmem [shape: f32[1,128], index: 4, kind: input, shape index: {}]
  %s5 = inlined_call_operand.hbm [shape: f32[128,128], index: 5, kind: input, shape index: {}]
  %s6 = inlined_call_operand.vmem [shape: f32[1,128], index: 6, kind: input, shape index: {}]
  %s7 = inlined_call_operand.hbm [shape: f32[16,128], index: 7, kind: output, shape index: {}]
  %s8 = sld [smem:[#allocation0]]
  $region62: #{tpu_custom_call.1} parent=0
    _
  %s10 = ssub.s32 1, %s8
  %s11 = scalar_select 0, %s10, %s8
  $region1: #{tpu_custom_call.1} parent=0
    #allocation3 [shape = 'u8[8192]{0}', space=vmem, size = 0x2000, scoped, tag = 'input window, operand 0, single buffered']
    #allocation4 [shape = 's32[1]{0}', space=sflag, size = 0x4, scoped, tag = 'scoped memory for tpu_custom_call.1']
    #allocation5 [shape = 's32[1]{0}', space=sflag, size = 0x4, scoped, tag = 'scoped memory for tpu_custom_call.1']
    #allocation6 [shape = 'u8[65536]{0}', space=vmem, size = 0x10000, scoped, tag = 'input window, operand 1, single buffered']
    #allocation7 [shape = 's32[1]{0}', space=sflag, size = 0x4, scoped, tag = 'scoped memory for tpu_custom_call.1']
    #allocation8 [shape = 'u8[65536]{0}', space=vmem, size = 0x10000, scoped, tag = 'input window, operand 3, single buffered']
    #allocation9 [shape = 'u8[65536]{0}', space=vmem, size = 0x10000, scoped, tag = 'input window, operand 5, single buffered']
    #allocation10 [shape = 's32[1]{0}', space=sflag, size = 0x4, scoped, tag = 'scoped memory for tpu_custom_call.1']
    #allocation11 [shape = 'u8[8192]{0}', space=vmem, size = 0x2000, scoped, tag = 'output window, operand 0, single buffered']
    %12 = vsyncpa [#allocation4], 0
    %13 = vsyncpa [#allocation7], 0
    %14 = vsyncpa [#allocation10], 0
    %15 = vsyncpa [#allocation5], 0
    // Predicated region
    $region2: #{tpu_custom_call.1} parent=1 // pred_check
      _
    $region3: #{tpu_custom_call.1} parent=1 // pred_check_branch
      %17 = sbr.rel (0) target = $region5
    $region4: #{tpu_custom_call.1} parent=1 // pred_region
      %s19 = ssub.s32 256, 256
      %20 = vsyncadd [#allocation4], %s19
      %s21 = sshll.u32 [#allocation3], 4
      %s22 = int_to_ptr.vmem [resolvable:$true] %s21
      %27 = dma.hbm_to_vmem [thread:$0]  %s0, 256, %s22, [#allocation4], 128, 128, 8
    $region5: #{tpu_custom_call.1} parent=1 // pred_fallthru
      _
    // Predicated region
    $region6: #{tpu_custom_call.1} parent=1 // pred_check
      _
    $region7: #{tpu_custom_call.1} parent=1 // pred_check_branch
      %29 = sbr.rel (0) target = $region9
    $region8: #{tpu_custom_call.1} parent=1 // pred_region
      %s31 = ssub.s32 2048, 2048
      %32 = vsyncadd [#allocation7], %s31
      %s33 = sshll.u32 [#allocation6], 4
      %s34 = int_to_ptr.vmem [resolvable:$true] %s33
      %39 = dma.hbm_to_vmem [thread:$0]  %s1, 2048, %s34, [#allocation7], 128, 128, 8
    $region9: #{tpu_custom_call.1} parent=1 // pred_fallthru
      _
    // Predicated region
    $region10: #{tpu_custom_call.1} parent=1 // pred_check
      _
    $region11: #{tpu_custom_call.1} parent=1 // pred_check_branch
      %41 = sbr.rel (0) target = $region13
    $region12: #{tpu_custom_call.1} parent=1 // pred_region
      _
    $region13: #{tpu_custom_call.1} parent=1 // pred_fallthru
      _
    // Predicated region
    $region14: #{tpu_custom_call.1} parent=1 // pred_check
      _
    $region15: #{tpu_custom_call.1} parent=1 // pred_check_branch
      %43 = sbr.rel (0) target = $region17
    $region16: #{tpu_custom_call.1} parent=1 // pred_region
      %s45 = ssub.s32 2048, 2048
      %46 = vsyncadd [#allocation7], %s45
      %s47 = sshll.u32 [#allocation8], 4
      %s48 = int_to_ptr.vmem [resolvable:$true] %s47
      %53 = dma.hbm_to_vmem [thread:$0]  %s3, 2048, %s48, [#allocation7], 128, 128, 8
    $region17: #{tpu_custom_call.1} parent=1 // pred_fallthru
      _
    // Predicated region
    $region18: #{tpu_custom_call.1} parent=1 // pred_check
      _
    $region19: #{tpu_custom_call.1} parent=1 // pred_check_branch
      %55 = sbr.rel (0) target = $region21
    $region20: #{tpu_custom_call.1} parent=1 // pred_region
      _
    $region21: #{tpu_custom_call.1} parent=1 // pred_fallthru
      _
    // Predicated region
    $region22: #{tpu_custom_call.1} parent=1 // pred_check
      _
    $region23: #{tpu_custom_call.1} parent=1 // pred_check_branch
      %57 = sbr.rel (0) target = $region25
    $region24: #{tpu_custom_call.1} parent=1 // pred_region
      %s59 = ssub.s32 2048, 2048
      %60 = vsyncadd [#allocation10], %s59
      %s61 = sshll.u32 [#allocation9], 4
      %s62 = int_to_ptr.vmem [resolvable:$true] %s61
      %67 = dma.hbm_to_vmem [thread:$0]  %s5, 2048, %s62, [#allocation10], 128, 128, 8
    $region25: #{tpu_custom_call.1} parent=1 // pred_fallthru
      _
    // Predicated region
    $region26: #{tpu_custom_call.1} parent=1 // pred_check
      _
    $region27: #{tpu_custom_call.1} parent=1 // pred_check_branch
      %69 = sbr.rel (0) target = $region29
    $region28: #{tpu_custom_call.1} parent=1 // pred_region
      _
    $region29: #{tpu_custom_call.1} parent=1 // pred_fallthru
      _
    // Predicated region
    $region30: #{tpu_custom_call.1} parent=1 // pred_check
      _
    $region31: #{tpu_custom_call.1} parent=1 // pred_check_branch
      %71 = sbr.rel (0) target = $region33
    $region32: #{tpu_custom_call.1} parent=1 // pred_region
      %72 = dma.done [#allocation4], 256
    $region33: #{tpu_custom_call.1} parent=1 // pred_fallthru
      _
    // Predicated region
    $region34: #{tpu_custom_call.1} parent=1 // pred_check
      _
    $region35: #{tpu_custom_call.1} parent=1 // pred_check_branch
      %74 = sbr.rel (0) target = $region37
    $region36: #{tpu_custom_call.1} parent=1 // pred_region
      %75 = dma.done [#allocation7], 2048
    $region37: #{tpu_custom_call.1} parent=1 // pred_fallthru
      _
    // Predicated region
    $region38: #{tpu_custom_call.1} parent=1 // pred_check
      _
    $region39: #{tpu_custom_call.1} parent=1 // pred_check_branch
      %77 = sbr.rel (0) target = $region41
    $region40: #{tpu_custom_call.1} parent=1 // pred_region
      %78 = dma.done [#allocation7], 2048
    $region41: #{tpu_custom_call.1} parent=1 // pred_fallthru
      _
    // Predicated region
    $region42: #{tpu_custom_call.1} parent=1 // pred_check
      _
    $region43: #{tpu_custom_call.1} parent=1 // pred_check_branch
      %80 = sbr.rel (0) target = $region45
    $region44: #{tpu_custom_call.1} parent=1 // pred_region
      %81 = dma.done [#allocation10], 2048
    $region45: #{tpu_custom_call.1} parent=1 // pred_fallthru
      _
    %p82 = scmp.eq.s32.totalorder 0, 0
    // Predicated region
    $region46: #{tpu_custom_call.1} parent=1 // pred_check
      %p83 = pneg %p82
    $region47: #{tpu_custom_call.1} parent=1 // pred_check_branch
      %85 = sbr.rel (%p83) target = $region49
    $region48: #{tpu_custom_call.1} parent=1 // pred_region
      %86 = vst [vmem:[#allocation2] sm:$0xff] 0.0
      %87 = vst [vmem:[#allocation2 + $0x8] sm:$0xff] 0.0
    $region49: #{tpu_custom_call.1} parent=1 // pred_fallthru
      _
    %v88 = vld [vmem:[#allocation3] sm:$0xff]
    %v89 = vld [vmem:[#allocation3 + $0x8] sm:$0xff]
    %v90 = vld [vmem:[#allocation6] sm:$0xff]
    %v91 = vld [vmem:[#allocation6 + $0x8] sm:$0xff]
    %v92 = vld [vmem:[#allocation6 + $0x10] sm:$0xff]
    %v93 = vld [vmem:[#allocation6 + $0x18] sm:$0xff]
    %v94 = vld [vmem:[#allocation6 + $0x20] sm:$0xff]
    %v95 = vld [vmem:[#allocation6 + $0x28] sm:$0xff]
    %v96 = vld [vmem:[#allocation6 + $0x30] sm:$0xff]
    %v97 = vld [vmem:[#allocation6 + $0x38] sm:$0xff]
    %v98 = vld [vmem:[#allocation6 + $0x40] sm:$0xff]
    %v99 = vld [vmem:[#allocation6 + $0x48] sm:$0xff]
    %v100 = vld [vmem:[#allocation6 + $0x50] sm:$0xff]
    %v101 = vld [vmem:[#allocation6 + $0x58] sm:$0xff]
    %v102 = vld [vmem:[#allocation6 + $0x60] sm:$0xff]
    %v103 = vld [vmem:[#allocation6 + $0x68] sm:$0xff]
    %v104 = vld [vmem:[#allocation6 + $0x70] sm:$0xff]
    %v105 = vld [vmem:[#allocation6 + $0x78] sm:$0xff]
    %v106 = vld [vmem:[%s2] sm:$0x1]
    %v108 = vlaneseq
    %v109 = vshrl.u32 %v108, 7
    %v110 = vsub.s32 0, %v109
    %v111 = vrot.slane %v106, %v110
    %113 = vmatprep.subr.mxu0 0.0
    %114 = vmatpush1.msra.mxu0 %v105
    %115 = vmatprep.subr.mxu0 0.0
    %116 = vmatpush1.msra.mxu0 %v104
    %117 = vmatprep.subr.mxu0 0.0
    %118 = vmatpush1.msra.mxu0 %v103
    %119 = vmatprep.subr.mxu0 0.0
    %120 = vmatpush1.msra.mxu0 %v102
    %121 = vmatprep.subr.mxu0 0.0
    %122 = vmatpush1.msra.mxu0 %v101
    %123 = vmatprep.subr.mxu0 0.0
    %124 = vmatpush1.msra.mxu0 %v100
    %125 = vmatprep.subr.mxu0 0.0
    %126 = vmatpush1.msra.mxu0 %v99
    %127 = vmatprep.subr.mxu0 0.0
    %128 = vmatpush1.msra.mxu0 %v98
    %129 = vmatprep.subr.mxu0 0.0
    %130 = vmatpush1.msra.mxu0 %v97
    %131 = vmatprep.subr.mxu0 0.0
    %132 = vmatpush1.msra.mxu0 %v96
    %133 = vmatprep.subr.mxu0 0.0
    %134 = vmatpush1.msra.mxu0 %v95
    %135 = vmatprep.subr.mxu0 0.0
    %136 = vmatpush1.msra.mxu0 %v94
    %137 = vmatprep.subr.mxu0 0.0
    %138 = vmatpush1.msra.mxu0 %v93
    %139 = vmatprep.subr.mxu0 0.0
    %140 = vmatpush1.msra.mxu0 %v92
    %141 = vmatprep.subr.mxu0 0.0
    %142 = vmatpush1.msra.mxu0 %v91
    %143 = vmatprep.subr.mxu0 0.0
    %144 = vmatpush1.msra.mxu0 %v90
    %145 = vmatprep.subr.mxu0 0.0
    %146 = vmatpush2.msra.mxu0 0.0
    %147 = vmatprep.subr.mxu0 0.0
    %148 = vmatpush2.msra.mxu0 0.0
    %149 = vmatprep.subr.mxu0 0.0
    %150 = vmatpush2.msra.mxu0 0.0
    %151 = vmatprep.subr.mxu0 0.0
    %152 = vmatpush2.msra.mxu0 0.0
    %153 = vmatprep.subr.mxu0 0.0
    %154 = vmatpush2.msra.mxu0 0.0
    %155 = vmatprep.subr.mxu0 0.0
    %156 = vmatpush2.msra.mxu0 0.0
    %157 = vmatprep.subr.mxu0 0.0
    %158 = vmatpush2.msra.mxu0 0.0
    %159 = vmatprep.subr.mxu0 0.0
    %160 = vmatpush2.msra.mxu0 0.0
    %161 = vmatprep.subr.mxu0 0.0
    %162 = vmatpush2.msra.mxu0 0.0
    %163 = vmatprep.subr.mxu0 0.0
    %164 = vmatpush2.msra.mxu0 0.0
    %165 = vmatprep.subr.mxu0 0.0
    %166 = vmatpush2.msra.mxu0 0.0
    %167 = vmatprep.subr.mxu0 0.0
    %168 = vmatpush2.msra.mxu0 0.0
    %169 = vmatprep.subr.mxu0 0.0
    %170 = vmatpush2.msra.mxu0 0.0
    %171 = vmatprep.subr.mxu0 0.0
    %172 = vmatpush2.msra.mxu0 0.0
    %173 = vmatprep.subr.mxu0 0.0
    %174 = vmatpush2.msra.mxu0 0.0
    %175 = vmatprep.subr.mxu0 0.0
    %176 = vmatpush2.msra.mxu0 0.0
    %177 = vmatprep.mubr.f32.mxu0 0.0
    %178 = vmatmul.mubr.f32.gmra.mxu0 %v88
    %v179 = vpop.f32.mrf.mxu0
    %v180 = vadd.f32 %v111, %v179
    %v181 = vpop.f32.mrf.mxu0
    %182 = vmatprep.mubr.f32.mxu0 0.0
    %183 = vmatmul.mubr.f32.gmra.mxu0 %v89
    %v184 = vpop.f32.mrf.mxu0
    %v185 = vadd.f32 %v111, %v184
    %v186 = vpop.f32.mrf.mxu0
    %187 = vdwg.mxu0
    %v188 = vld [vmem:[#allocation8] sm:$0xff]
    %v189 = vld [vmem:[#allocation8 + $0x8] sm:$0xff]
    %v190 = vld [vmem:[#allocation8 + $0x10] sm:$0xff]
    %v191 = vld [vmem:[#allocation8 + $0x18] sm:$0xff]
    %v192 = vld [vmem:[#allocation8 + $0x20] sm:$0xff]
    %v193 = vld [vmem:[#allocation8 + $0x28] sm:$0xff]
    %v194 = vld [vmem:[#allocation8 + $0x30] sm:$0xff]
    %v195 = vld [vmem:[#allocation8 + $0x38] sm:$0xff]
    %v196 = vld [vmem:[#allocation8 + $0x40] sm:$0xff]
    %v197 = vld [vmem:[#allocation8 + $0x48] sm:$0xff]
    %v198 = vld [vmem:[#allocation8 + $0x50] sm:$0xff]
    %v199 = vld [vmem:[#allocation8 + $0x58] sm:$0xff]
    %v200 = vld [vmem:[#allocation8 + $0x60] sm:$0xff]
    %v201 = vld [vmem:[#allocation8 + $0x68] sm:$0xff]
    %v202 = vld [vmem:[#allocation8 + $0x70] sm:$0xff]
    %v203 = vld [vmem:[#allocation8 + $0x78] sm:$0xff]
    %v204 = vld [vmem:[%s4] sm:$0x1]
    %v206 = vlaneseq
    %v207 = vshrl.u32 %v206, 7
    %v208 = vsub.s32 0, %v207
    %v209 = vrot.slane %v204, %v208
    %211 = vmatprep.subr.mxu0 0.0
    %212 = vmatpush1.msra.mxu0 %v203
    %213 = vmatprep.subr.mxu0 0.0
    %214 = vmatpush1.msra.mxu0 %v202
    %215 = vmatprep.subr.mxu0 0.0
    %216 = vmatpush1.msra.mxu0 %v201
    %217 = vmatprep.subr.mxu0 0.0
    %218 = vmatpush1.msra.mxu0 %v200
    %219 = vmatprep.subr.mxu0 0.0
    %220 = vmatpush1.msra.mxu0 %v199
    %221 = vmatprep.subr.mxu0 0.0
    %222 = vmatpush1.msra.mxu0 %v198
    %223 = vmatprep.subr.mxu0 0.0
    %224 = vmatpush1.msra.mxu0 %v197
    %225 = vmatprep.subr.mxu0 0.0
    %226 = vmatpush1.msra.mxu0 %v196
    %227 = vmatprep.subr.mxu0 0.0
    %228 = vmatpush1.msra.mxu0 %v195
    %229 = vmatprep.subr.mxu0 0.0
    %230 = vmatpush1.msra.mxu0 %v194
    %231 = vmatprep.subr.mxu0 0.0
    %232 = vmatpush1.msra.mxu0 %v193
    %233 = vmatprep.subr.mxu0 0.0
    %234 = vmatpush1.msra.mxu0 %v192
    %235 = vmatprep.subr.mxu0 0.0
    %236 = vmatpush1.msra.mxu0 %v191
    %237 = vmatprep.subr.mxu0 0.0
    %238 = vmatpush1.msra.mxu0 %v190
    %239 = vmatprep.subr.mxu0 0.0
    %240 = vmatpush1.msra.mxu0 %v189
    %241 = vmatprep.subr.mxu0 0.0
    %242 = vmatpush1.msra.mxu0 %v188
    %243 = vmatprep.subr.mxu0 0.0
    %244 = vmatpush2.msra.mxu0 0.0
    %245 = vmatprep.subr.mxu0 0.0
    %246 = vmatpush2.msra.mxu0 0.0
    %247 = vmatprep.subr.mxu0 0.0
    %248 = vmatpush2.msra.mxu0 0.0
    %249 = vmatprep.subr.mxu0 0.0
    %250 = vmatpush2.msra.mxu0 0.0
    %251 = vmatprep.subr.mxu0 0.0
    %252 = vmatpush2.msra.mxu0 0.0
    %253 = vmatprep.subr.mxu0 0.0
    %254 = vmatpush2.msra.mxu0 0.0
    %255 = vmatprep.subr.mxu0 0.0
    %256 = vmatpush2.msra.mxu0 0.0
    %257 = vmatprep.subr.mxu0 0.0
    %258 = vmatpush2.msra.mxu0 0.0
    %259 = vmatprep.subr.mxu0 0.0
    %260 = vmatpush2.msra.mxu0 0.0
    %261 = vmatprep.subr.mxu0 0.0
    %262 = vmatpush2.msra.mxu0 0.0
    %263 = vmatprep.subr.mxu0 0.0
    %264 = vmatpush2.msra.mxu0 0.0
    %265 = vmatprep.subr.mxu0 0.0
    %266 = vmatpush2.msra.mxu0 0.0
    %267 = vmatprep.subr.mxu0 0.0
    %268 = vmatpush2.msra.mxu0 0.0
    %269 = vmatprep.subr.mxu0 0.0
    %270 = vmatpush2.msra.mxu0 0.0
    %271 = vmatprep.subr.mxu0 0.0
    %272 = vmatpush2.msra.mxu0 0.0
    %273 = vmatprep.subr.mxu0 0.0
    %274 = vmatpush2.msra.mxu0 0.0
    %275 = vmatprep.mubr.f32.mxu0 0.0
    %276 = vmatmul.mubr.f32.gmra.mxu0 %v88
    %v277 = vpop.f32.mrf.mxu0
    %v278 = vadd.f32 %v209, %v277
    %v279 = vpop.f32.mrf.mxu0
    %280 = vmatprep.mubr.f32.mxu0 0.0
    %281 = vmatmul.mubr.f32.gmra.mxu0 %v89
    %v282 = vpop.f32.mrf.mxu0
    %v283 = vadd.f32 %v209, %v282
    %v284 = vpop.f32.mrf.mxu0
    %285 = vdwg.mxu0
    %v286 = vxor.u32 %v180, 2147483648
    %v287 = vxor.u32 %v185, 2147483648
    %v288 = vmul.f32 %v286, 1.442695
    %v289 = vpow.pop %v288
    %v290 = vmul.f32 %v287, 1.442695
    %v291 = vpow.pop %v290
    %v292 = vadd.f32 %v289, 1.0
    %v293 = vadd.f32 %v291, 1.0
    %v294 = vrcp.pop %v292
    %v295 = vmul.f32 1.0, %v294
    %v296 = vrcp.pop %v293
    %v297 = vmul.f32 1.0, %v296
    %v298 = vmul.f32 %v180, %v295
    %v299 = vmul.f32 %v185, %v297
    %v300 = vmul.f32 %v298, %v278
    %v301 = vmul.f32 %v299, %v283
    %v302 = vld [vmem:[#allocation2] sm:$0xff]
    %v303 = vld [vmem:[#allocation2 + $0x8] sm:$0xff]
    %v304 = vld [vmem:[#allocation9] sm:$0xff]
    %v305 = vld [vmem:[#allocation9 + $0x8] sm:$0xff]
    %v306 = vld [vmem:[#allocation9 + $0x10] sm:$0xff]
    %v307 = vld [vmem:[#allocation9 + $0x18] sm:$0xff]
    %v308 = vld [vmem:[#allocation9 + $0x20] sm:$0xff]
    %v309 = vld [vmem:[#allocation9 + $0x28] sm:$0xff]
    %v310 = vld [vmem:[#allocation9 + $0x30] sm:$0xff]
    %v311 = vld [vmem:[#allocation9 + $0x38] sm:$0xff]
    %v312 = vld [vmem:[#allocation9 + $0x40] sm:$0xff]
    %v313 = vld [vmem:[#allocation9 + $0x48] sm:$0xff]
    %v314 = vld [vmem:[#allocation9 + $0x50] sm:$0xff]
    %v315 = vld [vmem:[#allocation9 + $0x58] sm:$0xff]
    %v316 = vld [vmem:[#allocation9 + $0x60] sm:$0xff]
    %v317 = vld [vmem:[#allocation9 + $0x68] sm:$0xff]
    %v318 = vld [vmem:[#allocation9 + $0x70] sm:$0xff]
    %v319 = vld [vmem:[#allocation9 + $0x78] sm:$0xff]
    %320 = vmatprep.subr.mxu0 0.0
    %321 = vmatpush1.msra.mxu0 %v319
    %322 = vmatprep.subr.mxu0 0.0
    %323 = vmatpush1.msra.mxu0 %v318
    %324 = vmatprep.subr.mxu0 0.0
    %325 = vmatpush1.msra.mxu0 %v317
    %326 = vmatprep.subr.mxu0 0.0
    %327 = vmatpush1.msra.mxu0 %v316
    %328 = vmatprep.subr.mxu0 0.0
    %329 = vmatpush1.msra.mxu0 %v315
    %330 = vmatprep.subr.mxu0 0.0
    %331 = vmatpush1.msra.mxu0 %v314
    %332 = vmatprep.subr.mxu0 0.0
    %333 = vmatpush1.msra.mxu0 %v313
    %334 = vmatprep.subr.mxu0 0.0
    %335 = vmatpush1.msra.mxu0 %v312
    %336 = vmatprep.subr.mxu0 0.0
    %337 = vmatpush1.msra.mxu0 %v311
    %338 = vmatprep.subr.mxu0 0.0
    %339 = vmatpush1.msra.mxu0 %v310
    %340 = vmatprep.subr.mxu0 0.0
    %341 = vmatpush1.msra.mxu0 %v309
    %342 = vmatprep.subr.mxu0 0.0
    %343 = vmatpush1.msra.mxu0 %v308
    %344 = vmatprep.subr.mxu0 0.0
    %345 = vmatpush1.msra.mxu0 %v307
    %346 = vmatprep.subr.mxu0 0.0
    %347 = vmatpush1.msra.mxu0 %v306
    %348 = vmatprep.subr.mxu0 0.0
    %349 = vmatpush1.msra.mxu0 %v305
    %350 = vmatprep.subr.mxu0 0.0
    %351 = vmatpush1.msra.mxu0 %v304
    %352 = vmatprep.subr.mxu0 0.0
    %353 = vmatpush2.msra.mxu0 0.0
    %354 = vmatprep.subr.mxu0 0.0
    %355 = vmatpush2.msra.mxu0 0.0
    %356 = vmatprep.subr.mxu0 0.0
    %357 = vmatpush2.msra.mxu0 0.0
    %358 = vmatprep.subr.mxu0 0.0
    %359 = vmatpush2.msra.mxu0 0.0
    %360 = vmatprep.subr.mxu0 0.0
    %361 = vmatpush2.msra.mxu0 0.0
    %362 = vmatprep.subr.mxu0 0.0
    %363 = vmatpush2.msra.mxu0 0.0
    %364 = vmatprep.subr.mxu0 0.0
    %365 = vmatpush2.msra.mxu0 0.0
    %366 = vmatprep.subr.mxu0 0.0
    %367 = vmatpush2.msra.mxu0 0.0
    %368 = vmatprep.subr.mxu0 0.0
    %369 = vmatpush2.msra.mxu0 0.0
    %370 = vmatprep.subr.mxu0 0.0
    %371 = vmatpush2.msra.mxu0 0.0
    %372 = vmatprep.subr.mxu0 0.0
    %373 = vmatpush2.msra.mxu0 0.0
    %374 = vmatprep.subr.mxu0 0.0
    %375 = vmatpush2.msra.mxu0 0.0
    %376 = vmatprep.subr.mxu0 0.0
    %377 = vmatpush2.msra.mxu0 0.0
    %378 = vmatprep.subr.mxu0 0.0
    %379 = vmatpush2.msra.mxu0 0.0
    %380 = vmatprep.subr.mxu0 0.0
    %381 = vmatpush2.msra.mxu0 0.0
    %382 = vmatprep.subr.mxu0 0.0
    %383 = vmatpush2.msra.mxu0 0.0
    %384 = vmatprep.mubr.f32.mxu0 0.0
    %385 = vmatmul.mubr.f32.gmra.mxu0 %v300
    %v386 = vpop.f32.mrf.mxu0
    %v387 = vadd.f32 0.0, %v386
    %v388 = vpop.f32.mrf.mxu0
    %389 = vmatprep.mubr.f32.mxu0 0.0
    %390 = vmatmul.mubr.f32.gmra.mxu0 %v301
    %v391 = vpop.f32.mrf.mxu0
    %v392 = vadd.f32 0.0, %v391
    %v393 = vpop.f32.mrf.mxu0
    %394 = vdwg.mxu0
    %v395 = vadd.f32 %v302, %v387
    %v396 = vadd.f32 %v303, %v392
    %397 = vst [vmem:[#allocation2] sm:$0xff] %v395
    %398 = vst [vmem:[#allocation2 + $0x8] sm:$0xff] %v396
    // Predicated region
    $region50: #{tpu_custom_call.1} parent=1 // pred_check
      %p399 = pneg %p82
    $region51: #{tpu_custom_call.1} parent=1 // pred_check_branch
      %401 = sbr.rel (%p399) target = $region53
    $region52: #{tpu_custom_call.1} parent=1 // pred_region
      %v402 = vld [vmem:[#allocation2] sm:$0xff]
      %v403 = vld [vmem:[#allocation2 + $0x8] sm:$0xff]
      %v404 = vld [vmem:[%s6] sm:$0x1]
      %v406 = vlaneseq
      %v407 = vshrl.u32 %v406, 7
      %v408 = vsub.s32 0, %v407
      %v409 = vrot.slane %v404, %v408
      %v411 = vadd.f32 %v402, %v409
      %v412 = vadd.f32 %v403, %v409
      %413 = vst [vmem:[#allocation11] sm:$0xff] %v411
      %414 = vst [vmem:[#allocation11 + $0x8] sm:$0xff] %v412
    $region53: #{tpu_custom_call.1} parent=1 // pred_fallthru
      _
    // Predicated region
    $region54: #{tpu_custom_call.1} parent=1 // pred_check
      _
    $region55: #{tpu_custom_call.1} parent=1 // pred_check_branch
      %416 = sbr.rel (0) target = $region57
    $region56: #{tpu_custom_call.1} parent=1 // pred_region
      %s418 = ssub.s32 256, 256
      %419 = vsyncadd [#allocation5], %s418
      %s420 = sshll.u32 [#allocation11], 4
      %s421 = int_to_ptr.vmem [resolvable:$true] %s420
      %426 = dma.vmem_to_hbm [thread:$0]  %s421, 256, %s7, [#allocation5], 128, 128, 8
    $region57: #{tpu_custom_call.1} parent=1 // pred_fallthru
      _
    // Predicated region
    $region58: #{tpu_custom_call.1} parent=1 // pred_check
      _
    $region59: #{tpu_custom_call.1} parent=1 // pred_check_branch
      %428 = sbr.rel (0) target = $region61
    $region60: #{tpu_custom_call.1} parent=1 // pred_region
      %429 = dma.done [#allocation5], 256
    $region61: #{tpu_custom_call.1} parent=1 // pred_fallthru
      _
    %430 = vsyncpa [#allocation4], 1
    %431 = vsyncpa [#allocation7], 1
    %432 = vsyncpa [#allocation10], 1
    %433 = vsyncpa [#allocation5], 1

</llo_original>
